<compile_context>
chip_gen: v7x
topology: tpu7x:2x2x1
jax: 0.10.0
libtpu: 0.0.40
codegen_flags: <defaults>
</compile_context>

<pallas_src>
import jax
import jax.numpy as jnp
from jax import lax
from jax.experimental import pallas as pl
from jax.experimental.pallas import tpu as pltpu

_LANES = 128
_SUBLANES = 8
# 4096 rows x 128 lanes x 4 B = 2 MiB per f32 block.  With in+out double
# buffering that's ~8 MiB of VMEM: safe under every chip's default scoped
# VMEM limit (v5e 16 MiB, v6e 32 MiB, v7x 32 MiB scoped / 64 MiB physical).
_MAX_BLOCK_ROWS = 4096


def _copy_kernel(x_ref, o_ref):
    # Pure identity: copy the current tile.
    o_ref[...] = x_ref[...]


def _copy_2d_lane_dense(flat):
    """Tiled copy of a (rows, 128) array using large, lane-dense blocks."""
    rows, lanes = flat.shape
    block_rows = rows if rows <= _MAX_BLOCK_ROWS else _MAX_BLOCK_ROWS
    grid = (pl.cdiv(rows, block_rows),)
    nbytes = flat.size * flat.dtype.itemsize
    return pl.pallas_call(
        _copy_kernel,
        out_shape=jax.ShapeDtypeStruct((rows, lanes), flat.dtype),
        grid_spec=pl.GridSpec(
            grid=grid,
            in_specs=[pl.BlockSpec((block_rows, lanes), lambda i: (i, 0))],
            out_specs=pl.BlockSpec((block_rows, lanes), lambda i: (i, 0)),
        ),
        compiler_params=pltpu.CompilerParams(
            # Parallel row axis -> both v7x TensorCores get tiles; free on
            # v5e/v6e (single TC).
            dimension_semantics=("parallel",),
        ),
        cost_estimate=pl.CostEstimate(
            flops=0, transcendentals=0, bytes_accessed=2 * nbytes),
    )(flat)


def _copy_whole_array(obs):
    """Fallback: single full-array block (full dims are always a legal block
    shape) for element counts not divisible by the (8, 128) vreg tile."""
    nbytes = obs.size * obs.dtype.itemsize
    return pl.pallas_call(
        _copy_kernel,
        out_shape=jax.ShapeDtypeStruct(obs.shape, obs.dtype),
        cost_estimate=pl.CostEstimate(
            flops=0, transcendentals=0, bytes_accessed=2 * nbytes),
    )(obs)


def identity_pn_encoder_kernel(obs):
    """Pallas identity copy of obs (any shape / dtype)."""
    total = obs.size
    if total % (_SUBLANES * _LANES) == 0:
        # Lane-dense path: flatten to (rows, 128) so every store uses the full
        # 128-lane width; reshape back afterwards (pure layout plumbing).
        flat = obs.reshape(total // _LANES, _LANES)
        out = _copy_2d_lane_dense(flat)
        return out.reshape(obs.shape)
    return _copy_whole_array(obs)


def identity_pn_encoder(obs, detach=False, use_kernel=False):
    """Forward pass of IdentityPNEncoder.

    Default path: no kernel launch, no HBM traffic (identity is free).
    use_kernel=True: run the optimized Pallas copy kernel instead.
    """
    if detach:
        # PyTorch's obs.detach() -> stop_gradient in JAX.
        obs = lax.stop_gradient(obs)
    if not use_kernel:
        return obs
    return identity_pn_encoder_kernel(obs)


class IdentityPNEncoderPallas:
    """Mirror of the PyTorch module's interface (no parameters)."""

    def __init__(self, obs_shape, feature_dim, num_layers, num_filters,
                 output_logits, depth_segm=False):
        assert len(obs_shape) == 2
        # Faithful to the reference module, which assigns the obs_shape tuple.
        self.feature_dim = obs_shape

    def __call__(self, obs, detach=False, use_kernel=False):
        return identity_pn_encoder(obs, detach=detach, use_kernel=use_kernel)

    def copy_conv_weights_from(self, source):
        pass  # no weights

    def log(self, L, step, log_freq):
        pass  # no-op


if __name__ == "__main__":
    key = jax.random.PRNGKey(0)
    B, N, D = 2, 16, 32  # obs_shape = (N, D) = (16, 32), batch = 2
    obs = jax.random.normal(key, (B, N, D), dtype=jnp.float32)

    enc = IdentityPNEncoderPallas(obs_shape=(N, D), feature_dim=64,
                                  num_layers=2, num_filters=32,
                                  output_logits=False)

    # 1) Default (recommended) path: no kernel, no traffic; detach handled.
    out_fast = enc(obs, detach=True)
    jax.block_until_ready(out_fast)
    assert out_fast.shape == obs.shape and out_fast.dtype == obs.dtype
    assert bool(jnp.array_equal(out_fast, obs))

    # 2) Explicit Pallas kernel path (lane-dense tiled copy).
    out_kernel = enc(obs, use_kernel=True)
    jax.block_until_ready(out_kernel)
    assert out_kernel.shape == obs.shape and out_kernel.dtype == obs.dtype
    assert bool(jnp.array_equal(out_kernel, obs))

    # 3) Fallback single-block path (element count not a multiple of 8*128).
    obs2 = jax.random.normal(key, (2, 16, 24), dtype=jnp.float32)
    out2 = identity_pn_encoder_kernel(obs2)
    jax.block_until_ready(out2)
    assert bool(jnp.array_equal(out2, obs2))

    # 4) Larger lane-dense case that exercises the multi-tile grid
    #    (rows = 8192 -> two 4096x128 blocks; parallel axis feeds both v7x TCs).
    obs3 = jax.random.normal(key, (8, 1024, 128), dtype=jnp.float32)
    out3 = identity_pn_encoder_kernel(obs3)
    jax.block_until_ready(out3)
    assert out3.shape == obs3.shape and bool(jnp.array_equal(out3, obs3))

    print("KERNEL_OK")
</pallas_src>

<mosaic_0001>
module attributes {stable_mosaic.version = 11 : i64} {
  func.func @_copy_kernel(%arg0: i32, %arg1: memref<8x128xf32, #tpu.memory_space<vmem>>, %arg2: memref<8x128xf32, #tpu.memory_space<vmem>>) attributes {dimension_semantics = [#tpu.dimension_semantics<parallel>], iteration_bounds = array<i64: 1>, scalar_prefetch = 0 : i64, scratch_operands = 0 : i64, tpu.core_type = #tpu.core_type<tc>, window_params = [{transform_indices = @transform_0, window_bounds = array<i64: 8, 128>}, {transform_indices = @transform_1, window_bounds = array<i64: 8, 128>}]} {
    %c0 = arith.constant 0 : index
    %c0_0 = arith.constant 0 : index
    %0 = vector.load %arg1[%c0, %c0_0] : memref<8x128xf32, #tpu.memory_space<vmem>>, vector<8x128xf32>
    %c0_1 = arith.constant 0 : index
    %c0_2 = arith.constant 0 : index
    %1 = vector.load %arg2[%c0_1, %c0_2] : memref<8x128xf32, #tpu.memory_space<vmem>>, vector<8x128xf32>
    tpu.vector_store %arg2[%c0_1, %c0_2], %0 {strides = array<i32>} : memref<8x128xf32, #tpu.memory_space<vmem>>, vector<8x128xf32>,
    return
  }
  func.func @transform_0(%arg0: i32) -> (i32, i32) {
    %c0_i32 = arith.constant 0 : i32
    %c0_i32_0 = arith.constant 0 : i32
    return %arg0, %c0_i32 : i32, i32
  }
  func.func @transform_1(%arg0: i32) -> (i32, i32) {
    %c0_i32 = arith.constant 0 : i32
    %c0_i32_0 = arith.constant 0 : i32
    return %arg0, %c0_i32 : i32, i32
  }
}

</mosaic_0001>

<llo_original>
// kernel: tpu_custom_call.1
$region0: #{tpu_custom_call.1}
  #allocation0 [shape = 'u32[]', space=smem, size = 0x4, offset = 0x4, fixed_abs, tag = 'smem constant byte address 0x4 - core index']
  #allocation1 [shape = 'u32[144,128]{1,0:T(1,128)}', space=vmem, size = 0x12000, scoped, tag = 'internal scratch']
  %s0 = inlined_call_operand.hbm [shape: f32[8,128], index: 0, kind: input, shape index: {}]
  %s1 = inlined_call_operand.hbm [shape: f32[8,128], index: 1, kind: output, shape index: {}]
  %s2 = sld [smem:[#allocation0]]
  $region18: #{tpu_custom_call.1} parent=0
    _
  %s4 = ssub.s32 1, %s2
  %s5 = scalar_select 0, %s4, %s2
  $region1: #{tpu_custom_call.1} parent=0
    #allocation2 [shape = 'u8[4096]{0}', space=vmem, size = 0x1000, scoped, tag = 'input window, operand 0, single buffered']
    #allocation3 [shape = 's32[1]{0}', space=sflag, size = 0x4, scoped, tag = 'scoped memory for tpu_custom_call.1']
    #allocation4 [shape = 's32[1]{0}', space=sflag, size = 0x4, scoped, tag = 'scoped memory for tpu_custom_call.1']
    #allocation5 [shape = 'u8[4096]{0}', space=vmem, size = 0x1000, scoped, tag = 'output window, operand 0, single buffered']
    %6 = vsyncpa [#allocation3], 0
    %7 = vsyncpa [#allocation4], 0
    // Predicated region
    $region2: #{tpu_custom_call.1} parent=1 // pred_check
      _
    $region3: #{tpu_custom_call.1} parent=1 // pred_check_branch
      %9 = sbr.rel (0) target = $region5
    $region4: #{tpu_custom_call.1} parent=1 // pred_region
      %s11 = ssub.s32 128, 128
      %12 = vsyncadd [#allocation3], %s11
      %s14 = sshll.u32 [#allocation2], 4
      %s15 = int_to_ptr.vmem [resolvable:$true] %s14
      %17 = dma.hbm_to_vmem [thread:$0]  %s0, 128, %s15, [#allocation3]
    $region5: #{tpu_custom_call.1} parent=1 // pred_fallthru
      _
    // Predicated region
    $region6: #{tpu_custom_call.1} parent=1 // pred_check
      _
    $region7: #{tpu_custom_call.1} parent=1 // pred_check_branch
      %19 = sbr.rel (0) target = $region9
    $region8: #{tpu_custom_call.1} parent=1 // pred_region
      %20 = dma.done [#allocation3], 128
    $region9: #{tpu_custom_call.1} parent=1 // pred_fallthru
      _
    %v21 = vld [vmem:[#allocation2] sm:$0xff]
    %22 = vst [vmem:[#allocation5] sm:$0xff] %v21
    // Predicated region
    $region10: #{tpu_custom_call.1} parent=1 // pred_check
      _
    $region11: #{tpu_custom_call.1} parent=1 // pred_check_branch
      %24 = sbr.rel (0) target = $region13
    $region12: #{tpu_custom_call.1} parent=1 // pred_region
      %s26 = ssub.s32 128, 128
      %27 = vsyncadd [#allocation4], %s26
      %s29 = sshll.u32 [#allocation5], 4
      %s30 = int_to_ptr.vmem [resolvable:$true] %s29
      %32 = dma.vmem_to_hbm [thread:$0]  %s30, 128, %s1, [#allocation4]
    $region13: #{tpu_custom_call.1} parent=1 // pred_fallthru
      _
    // Predicated region
    $region14: #{tpu_custom_call.1} parent=1 // pred_check
      _
    $region15: #{tpu_custom_call.1} parent=1 // pred_check_branch
      %34 = sbr.rel (0) target = $region17
    $region16: #{tpu_custom_call.1} parent=1 // pred_region
      %35 = dma.done [#allocation4], 128
    $region17: #{tpu_custom_call.1} parent=1 // pred_fallthru
      _
    %36 = vsyncpa [#allocation3], 1
    %37 = vsyncpa [#allocation4], 1

</llo_original>
